<compile_context>
chip_gen: v6e
topology: v6e:2x2x1
jax: 0.10.0
libtpu: 0.0.40
codegen_flags: <defaults>
</compile_context>

<pallas_src>
import functools
import math

import numpy as np
import jax
import jax.numpy as jnp
from jax.experimental import pallas as pl
from jax.experimental.pallas import tpu as pltpu

EPS = 1e-5


# ---------------------------------------------------------------------------
# Kernel
# ---------------------------------------------------------------------------
def _ln_over_dim(t, alpha, beta):
    # LN(dim): normalize over the feature (sublane) axis of a [D, M] tile.
    # Single-pass moments halve the cross-sublane XLU reductions; rsqrt goes to EUP.
    mean = jnp.mean(t, axis=0, keepdims=True)
    ex2 = jnp.mean(t * t, axis=0, keepdims=True)
    var = jnp.maximum(ex2 - mean * mean, 0.0)
    y = (t - mean) * jax.lax.rsqrt(var + EPS)
    return y * alpha + beta                      # alpha/beta are [D, 1]


def hypergraph_rep_kernel(
    x_ref,          # (D, B*N)      fp32   input in 'd (b n)' layout
    fc_in_w_ref,    # (D, D)        bf16   motion_fc_in weight (PyTorch [out, in])
    fc_in_b_ref,    # (D, 1)        fp32
    dyn_att_ref,    # (L, D, D)     bf16   precomputed masked dynamic attention
    gcn_w_ref,      # (L, B*N, B*N) bf16   HyperGraphConvolution weight, block-diag over batch
    gcn_b_ref,      # (L, 1, B*N)   fp32   bias tiled over batch
    ln1_a_ref,      # (L, D, 1)            gcn_spatial_fc = LN(dim)
    ln1_b_ref,      # (L, D, 1)
    fc0_w_ref,      # (L, B*N, B*N) bf16   Temporal_FC(seq) weight, pre-transposed + block-diag
    fc0_b_ref,      # (L, 1, B*N)
    ln0_a_ref,      # (L, D, 1)            norm0 = LN(dim)
    ln0_b_ref,      # (L, D, 1)
    fc_out_w_ref,   # (D, D)        bf16   motion_fc_out weight
    fc_out_b_ref,   # (D, 1)        fp32
    out_ref,        # (D, B*N)      fp32
    *,
    num_layers,
):
    bf16 = jnp.bfloat16
    x = x_ref[...]

    # motion_fc_in acts on the feature axis D:  W_in @ x_d(bn) + b_in
    h = jnp.dot(fc_in_w_ref[...], x.astype(bf16),
                preferred_element_type=jnp.float32) + fc_in_b_ref[...]

    for l in range(num_layers):                      # static unroll over blocks
        hb = h.astype(bf16)

        # --- HyperGraphConvolution (seq -> seq), batch handled by block-diag weight ---
        support = jnp.dot(hb, gcn_w_ref[l], preferred_element_type=jnp.float32)
        y = (h
             + jnp.dot(dyn_att_ref[l], support.astype(bf16),
                       preferred_element_type=jnp.float32)
             + gcn_b_ref[l])

        # --- gcn_spatial_fc = LN(dim) ---
        y = _ln_over_dim(y, ln1_a_ref[l], ln1_b_ref[l])

        # --- fc0 = Temporal_FC(seq): Linear over N axis (weight pre-transposed) ---
        t = jnp.dot((h + y).astype(bf16), fc0_w_ref[l],
                    preferred_element_type=jnp.float32) + fc0_b_ref[l]

        # --- norm0 = LN(dim) ---
        t = _ln_over_dim(t, ln0_a_ref[l], ln0_b_ref[l])

        # residual
        h = h + t

    # motion_fc_out acts on the feature axis D
    out_ref[...] = (jnp.dot(fc_out_w_ref[...], h.astype(bf16),
                            preferred_element_type=jnp.float32)
                    + fc_out_b_ref[...])


# ---------------------------------------------------------------------------
# Wrapper
# ---------------------------------------------------------------------------
@jax.jit
def hypergraph_rep_forward(motion_input, params):
    """motion_input: [B, N(seq), D(=3*node_n)] float32 -> [B, N, D]."""
    B, N, D = motion_input.shape
    L = params["gcn_w"].shape[0]
    BN = B * N
    bf16 = jnp.bfloat16

    # layout: b n d -> d (b n)  (batch folded into the lane axis)
    x_dbn = jnp.transpose(motion_input, (2, 0, 1)).reshape(D, BN)

    # --- wrapper-side precompute (batch-independent, fused by XLA) ---------------
    # masked dynamic attention for all layers at once  -> (L, D, D)
    dyn_att = (params["joint_adj"][None] * params["joint_att"]
               + params["part_adj"][None] * params["part_att"]
               + params["pose_adj"][None] * params["pose_att"]
               + params["global_att"]).astype(bf16)

    # per-layer seq-axis weights -> block-diagonal over batch  -> (L, B*N, B*N)
    eye_b = jnp.eye(B, dtype=jnp.float32)

    def bdiag(w):  # (L, N, N) -> (L, B*N, B*N)
        return jnp.einsum("bc,lnm->lbncm", eye_b, w).reshape(L, BN, BN)

    gcn_w_bd = bdiag(params["gcn_w"]).astype(bf16)
    fc0_wt_bd = bdiag(jnp.transpose(params["fc0_w"], (0, 2, 1))).astype(bf16)

    gcn_b_t = jnp.tile(params["gcn_b"], (1, B)).reshape(L, 1, BN)
    fc0_b_t = jnp.tile(params["fc0_b"], (1, B)).reshape(L, 1, BN)

    ln1_a = params["ln1_a"].reshape(L, D, 1)
    ln1_b = params["ln1_b"].reshape(L, D, 1)
    ln0_a = params["ln0_a"].reshape(L, D, 1)
    ln0_b = params["ln0_b"].reshape(L, D, 1)

    fc_in_w = params["fc_in_w"].astype(bf16)
    fc_in_b = params["fc_in_b"].reshape(D, 1)
    fc_out_w = params["fc_out_w"].astype(bf16)
    fc_out_b = params["fc_out_b"].reshape(D, 1)

    # Grid-less call: every operand is a single whole-array VMEM block (all tiny),
    # so there is no per-grid-step overhead and no double-buffering of constants.
    out_dbn = pl.pallas_call(
        functools.partial(hypergraph_rep_kernel, num_layers=L),
        out_shape=jax.ShapeDtypeStruct((D, BN), jnp.float32),
    )(
        x_dbn,
        fc_in_w, fc_in_b,
        dyn_att,
        gcn_w_bd, gcn_b_t,
        ln1_a, ln1_b,
        fc0_wt_bd, fc0_b_t,
        ln0_a, ln0_b,
        fc_out_w, fc_out_b,
    )

    # d (b n) -> b n d
    return jnp.transpose(out_dbn.reshape(D, B, N), (1, 2, 0))


# ---------------------------------------------------------------------------
# Synthetic dataset masks + deterministic parameter init
# ---------------------------------------------------------------------------
def build_masks(node_n, joint_edges, part_edges, pose_edges):
    def adj(edges):
        a = np.zeros((node_n, node_n))
        for item in edges:
            for i in item:
                for j in item:
                    a[j, i] = 1
                    a[i, j] = 1
        return a

    def expand3(a):
        m = np.zeros((node_n * 3, node_n * 3))
        for i in range(node_n):
            for j in range(node_n):
                if a[i, j] == 1:
                    m[i * 3:(i + 1) * 3, j * 3:(j + 1) * 3] = 1
        return m.astype(np.float32)

    return (expand3(adj(joint_edges)),
            expand3(adj(part_edges)),
            expand3(adj(pose_edges)))


def init_params(key, D, N, L, node_n_joints):
    # Synthetic skeleton definition (node_n_joints joints, expanded x3 -> D).
    joint_edges = [[0, 1], [1, 2], [2, 3], [3, 4], [4, 5], [5, 6], [6, 7], [7, 0]]
    part_edges = [[0, 1, 2, 3], [4, 5, 6, 7]]
    pose_edges = [[0, 1, 2, 3, 4, 5, 6, 7]]
    joint_adj, part_adj, pose_adj = build_masks(node_n_joints, joint_edges,
                                                part_edges, pose_edges)

    ks = jax.random.split(key, 10)
    u = lambda k, shape, b: jax.random.uniform(k, shape, jnp.float32, -b, b)

    stdv = 1.0 / math.sqrt(N)          # HyperGraphConvolution.reset_parameters
    fcin_bound = 1.0 / math.sqrt(D)    # ~ default nn.Linear init scale
    xav_nn = math.sqrt(6.0 / (N + N))  # xavier bound (gain folded to 1.0 — see note)
    xav_dd = math.sqrt(6.0 / (D + D))
    # NOTE: the PyTorch module uses xavier with gain=1e-8 for fc0 / motion_fc_out,
    # which makes those paths numerically degenerate; here we use the same init
    # family with unit gain so the kernel's full compute path is exercised.

    return dict(
        fc_in_w=u(ks[0], (D, D), fcin_bound),
        fc_in_b=u(ks[1], (1, D), fcin_bound),
        fc_out_w=u(ks[2], (D, D), xav_dd),
        fc_out_b=jnp.zeros((1, D), jnp.float32),
        joint_adj=jnp.asarray(joint_adj),
        part_adj=jnp.asarray(part_adj),
        pose_adj=jnp.asarray(pose_adj),
        gcn_w=u(ks[3], (L, N, N), stdv),
        joint_att=u(ks[4], (L, D, D), stdv),
        part_att=u(ks[5], (L, D, D), stdv),
        pose_att=u(ks[6], (L, D, D), stdv),
        global_att=u(ks[7], (L, D, D), stdv),
        gcn_b=u(ks[8], (L, N), stdv),
        ln1_a=jnp.ones((L, D), jnp.float32),
        ln1_b=jnp.zeros((L, D), jnp.float32),
        fc0_w=u(ks[9], (L, N, N), xav_nn),
        fc0_b=jnp.zeros((L, N), jnp.float32),
        ln0_a=jnp.ones((L, D), jnp.float32),
        ln0_b=jnp.zeros((L, D), jnp.float32),
    )


# ---------------------------------------------------------------------------
# Pure-JAX fp32 reference (mirrors the PyTorch forward) for a correctness check
# ---------------------------------------------------------------------------
def reference_forward(x_bnd, p):
    def ln_dim(t, a, b):
        mean = jnp.mean(t, axis=1, keepdims=True)
        var = jnp.mean((t - mean) ** 2, axis=1, keepdims=True)
        return (t - mean) / jnp.sqrt(var + EPS) * a[None, :, None] + b[None, :, None]

    h = x_bnd @ p["fc_in_w"].T + p["fc_in_b"][0]
    h = jnp.transpose(h, (0, 2, 1))  # [B, D, N]
    L = p["gcn_w"].shape[0]
    for l in range(L):
        support = jnp.einsum("bdn,nm->bdm", h, p["gcn_w"][l])
        dyn = (p["joint_adj"] * p["joint_att"][l]
               + p["part_adj"] * p["part_att"][l]
               + p["pose_adj"] * p["pose_att"][l]
               + p["global_att"][l])
        y = h + jnp.einsum("de,ben->bdn", dyn, support) + p["gcn_b"][l][None, None, :]
        y = ln_dim(y, p["ln1_a"][l], p["ln1_b"][l])
        t = jnp.einsum("bdn,mn->bdm", h + y, p["fc0_w"][l]) + p["fc0_b"][l][None, None, :]
        t = ln_dim(t, p["ln0_a"][l], p["ln0_b"][l])
        h = h + t
    h = jnp.transpose(h, (0, 2, 1))
    return h @ p["fc_out_w"].T + p["fc_out_b"][0]


# ---------------------------------------------------------------------------
if __name__ == "__main__":
    B = 2                 # batch
    N = 16                # seq_len  (motion_mlp.seq_len)
    node_n_joints = 8     # dataset.node_n
    D = node_n_joints * 3 # hidden_dim == motion.dim == 3 * node_n = 24
    L = 2                 # motion_mlp.num_layers

    key = jax.random.PRNGKey(0)
    kx, kp = jax.random.split(key)
    motion_input = jax.random.normal(kx, (B, N, D), jnp.float32)
    params = init_params(kp, D, N, L, node_n_joints)

    out = hypergraph_rep_forward(motion_input, params)
    out = jax.block_until_ready(out)

    # Kernel uses bf16 MXU operands with fp32 accumulation/LN; the fp32 reference
    # therefore gets a bf16-sized tolerance (structural bugs would be O(1) off).
    ref = reference_forward(motion_input, params)
    np.testing.assert_allclose(np.asarray(out), np.asarray(ref), rtol=1e-1, atol=1e-1)

    print("KERNEL_OK")
</pallas_src>

<mosaic_0001>
module attributes {stable_mosaic.version = 11 : i64} {
  func.func @hypergraph_rep_kernel(%arg0: memref<24x32xf32, #tpu.memory_space<vmem>>, %arg1: memref<24x24xbf16, #tpu.memory_space<vmem>>, %arg2: memref<24x1xf32, #tpu.memory_space<vmem>>, %arg3: memref<2x24x24xbf16, #tpu.memory_space<vmem>>, %arg4: memref<2x32x32xbf16, #tpu.memory_space<vmem>>, %arg5: memref<2x1x32xf32, #tpu.memory_space<vmem>>, %arg6: memref<2x24x1xf32, #tpu.memory_space<vmem>>, %arg7: memref<2x24x1xf32, #tpu.memory_space<vmem>>, %arg8: memref<2x32x32xbf16, #tpu.memory_space<vmem>>, %arg9: memref<2x1x32xf32, #tpu.memory_space<vmem>>, %arg10: memref<2x24x1xf32, #tpu.memory_space<vmem>>, %arg11: memref<2x24x1xf32, #tpu.memory_space<vmem>>, %arg12: memref<24x24xbf16, #tpu.memory_space<vmem>>, %arg13: memref<24x1xf32, #tpu.memory_space<vmem>>, %arg14: memref<24x32xf32, #tpu.memory_space<vmem>>) attributes {dimension_semantics = [], scalar_prefetch = 0 : i64, scratch_operands = 0 : i64, tpu.core_type = #tpu.core_type<tc>} {
    %c0 = arith.constant 0 : index
    %c0_0 = arith.constant 0 : index
    %0 = vector.load %arg0[%c0, %c0_0] : memref<24x32xf32, #tpu.memory_space<vmem>>, vector<24x32xf32>
    %c0_1 = arith.constant 0 : index
    %c0_2 = arith.constant 0 : index
    %1 = vector.load %arg1[%c0_1, %c0_2] : memref<24x24xbf16, #tpu.memory_space<vmem>>, vector<24x24xbf16>
    %2 = arith.truncf %0 : vector<24x32xf32> to vector<24x32xbf16>
    %cst = arith.constant dense<0.000000e+00> : vector<24x32xf32>
    %3 = tpu.matmul %1, %2, %cst {dimension_numbers = #tpu.dot_dimension_numbers<[1], [0], [0], [1], [0, 0, 1, 1], [], []>} : vector<24x24xbf16>, vector<24x32xbf16>, vector<24x32xf32> -> vector<24x32xf32>
    %c0_3 = arith.constant 0 : index
    %c0_4 = arith.constant 0 : index
    %4 = vector.load %arg2[%c0_3, %c0_4] : memref<24x1xf32, #tpu.memory_space<vmem>>, vector<24x1xf32>
    %5 = vector.broadcast %4 : vector<24x1xf32> to vector<24x32xf32>
    %6 = arith.addf %3, %5 : vector<24x32xf32>
    %7 = arith.truncf %6 : vector<24x32xf32> to vector<24x32xbf16>
    %c0_5 = arith.constant 0 : index
    %c0_6 = arith.constant 0 : index
    %c0_7 = arith.constant 0 : index
    %8 = vector.load %arg4[%c0_5, %c0_6, %c0_7] : memref<2x32x32xbf16, #tpu.memory_space<vmem>>, vector<1x32x32xbf16>
    %9 = vector.shape_cast %8 : vector<1x32x32xbf16> to vector<32x32xbf16>
    %cst_8 = arith.constant dense<0.000000e+00> : vector<24x32xf32>
    %10 = tpu.matmul %7, %9, %cst_8 {dimension_numbers = #tpu.dot_dimension_numbers<[1], [0], [0], [1], [0, 0, 1, 1], [], []>} : vector<24x32xbf16>, vector<32x32xbf16>, vector<24x32xf32> -> vector<24x32xf32>
    %c0_9 = arith.constant 0 : index
    %c0_10 = arith.constant 0 : index
    %c0_11 = arith.constant 0 : index
    %11 = vector.load %arg3[%c0_9, %c0_10, %c0_11] : memref<2x24x24xbf16, #tpu.memory_space<vmem>>, vector<1x24x24xbf16>
    %12 = vector.shape_cast %11 : vector<1x24x24xbf16> to vector<24x24xbf16>
    %13 = arith.truncf %10 : vector<24x32xf32> to vector<24x32xbf16>
    %cst_12 = arith.constant dense<0.000000e+00> : vector<24x32xf32>
    %14 = tpu.matmul %12, %13, %cst_12 {dimension_numbers = #tpu.dot_dimension_numbers<[1], [0], [0], [1], [0, 0, 1, 1], [], []>} : vector<24x24xbf16>, vector<24x32xbf16>, vector<24x32xf32> -> vector<24x32xf32>
    %15 = arith.addf %6, %14 : vector<24x32xf32>
    %c0_13 = arith.constant 0 : index
    %c0_14 = arith.constant 0 : index
    %c0_15 = arith.constant 0 : index
    %16 = vector.load %arg5[%c0_13, %c0_14, %c0_15] : memref<2x1x32xf32, #tpu.memory_space<vmem>>, vector<1x1x32xf32>
    %17 = vector.shape_cast %16 : vector<1x1x32xf32> to vector<1x32xf32>
    %18 = vector.broadcast %17 : vector<1x32xf32> to vector<24x32xf32>
    %19 = arith.addf %15, %18 : vector<24x32xf32>
    %c0_16 = arith.constant 0 : index
    %c0_17 = arith.constant 0 : index
    %c0_18 = arith.constant 0 : index
    %20 = vector.load %arg6[%c0_16, %c0_17, %c0_18] : memref<2x24x1xf32, #tpu.memory_space<vmem>>, vector<1x24x1xf32>
    %21 = vector.shape_cast %20 : vector<1x24x1xf32> to vector<24x1xf32>
    %c0_19 = arith.constant 0 : index
    %c0_20 = arith.constant 0 : index
    %c0_21 = arith.constant 0 : index
    %22 = vector.load %arg7[%c0_19, %c0_20, %c0_21] : memref<2x24x1xf32, #tpu.memory_space<vmem>>, vector<1x24x1xf32>
    %23 = vector.shape_cast %22 : vector<1x24x1xf32> to vector<24x1xf32>
    %cst_22 = arith.constant dense<0.000000e+00> : vector<32xf32>
    %24 = vector.multi_reduction <add>, %19, %cst_22 [0] : vector<24x32xf32> to vector<32xf32>
    %25 = vector.shape_cast %24 : vector<32xf32> to vector<1x32xf32>
    %cst_23 = arith.constant 2.400000e+01 : f32
    %26 = vector.broadcast %cst_23 : f32 to vector<1x32xf32>
    %27 = arith.divf %25, %26 : vector<1x32xf32>
    %28 = arith.mulf %19, %19 : vector<24x32xf32>
    %cst_24 = arith.constant dense<0.000000e+00> : vector<32xf32>
    %29 = vector.multi_reduction <add>, %28, %cst_24 [0] : vector<24x32xf32> to vector<32xf32>
    %30 = vector.shape_cast %29 : vector<32xf32> to vector<1x32xf32>
    %cst_25 = arith.constant 2.400000e+01 : f32
    %31 = vector.broadcast %cst_25 : f32 to vector<1x32xf32>
    %32 = arith.divf %30, %31 : vector<1x32xf32>
    %33 = arith.mulf %27, %27 : vector<1x32xf32>
    %34 = arith.subf %32, %33 : vector<1x32xf32>
    %cst_26 = arith.constant 0.000000e+00 : f32
    %35 = vector.broadcast %cst_26 : f32 to vector<1x32xf32>
    %36 = arith.maximumf %34, %35 : vector<1x32xf32>
    %37 = vector.broadcast %27 : vector<1x32xf32> to vector<24x32xf32>
    %38 = arith.subf %19, %37 : vector<24x32xf32>
    %cst_27 = arith.constant 9.99999974E-6 : f32
    %39 = vector.broadcast %cst_27 : f32 to vector<1x32xf32>
    %40 = arith.addf %36, %39 : vector<1x32xf32>
    %41 = math.rsqrt %40 : vector<1x32xf32>
    %42 = vector.broadcast %41 : vector<1x32xf32> to vector<24x32xf32>
    %43 = arith.mulf %38, %42 : vector<24x32xf32>
    %44 = vector.broadcast %21 : vector<24x1xf32> to vector<24x32xf32>
    %45 = arith.mulf %43, %44 : vector<24x32xf32>
    %46 = vector.broadcast %23 : vector<24x1xf32> to vector<24x32xf32>
    %47 = arith.addf %45, %46 : vector<24x32xf32>
    %48 = arith.addf %6, %47 : vector<24x32xf32>
    %49 = arith.truncf %48 : vector<24x32xf32> to vector<24x32xbf16>
    %c0_28 = arith.constant 0 : index
    %c0_29 = arith.constant 0 : index
    %c0_30 = arith.constant 0 : index
    %50 = vector.load %arg8[%c0_28, %c0_29, %c0_30] : memref<2x32x32xbf16, #tpu.memory_space<vmem>>, vector<1x32x32xbf16>
    %51 = vector.shape_cast %50 : vector<1x32x32xbf16> to vector<32x32xbf16>
    %cst_31 = arith.constant dense<0.000000e+00> : vector<24x32xf32>
    %52 = tpu.matmul %49, %51, %cst_31 {dimension_numbers = #tpu.dot_dimension_numbers<[1], [0], [0], [1], [0, 0, 1, 1], [], []>} : vector<24x32xbf16>, vector<32x32xbf16>, vector<24x32xf32> -> vector<24x32xf32>
    %c0_32 = arith.constant 0 : index
    %c0_33 = arith.constant 0 : index
    %c0_34 = arith.constant 0 : index
    %53 = vector.load %arg9[%c0_32, %c0_33, %c0_34] : memref<2x1x32xf32, #tpu.memory_space<vmem>>, vector<1x1x32xf32>
    %54 = vector.shape_cast %53 : vector<1x1x32xf32> to vector<1x32xf32>
    %55 = vector.broadcast %54 : vector<1x32xf32> to vector<24x32xf32>
    %56 = arith.addf %52, %55 : vector<24x32xf32>
    %c0_35 = arith.constant 0 : index
    %c0_36 = arith.constant 0 : index
    %c0_37 = arith.constant 0 : index
    %57 = vector.load %arg10[%c0_35, %c0_36, %c0_37] : memref<2x24x1xf32, #tpu.memory_space<vmem>>, vector<1x24x1xf32>
    %58 = vector.shape_cast %57 : vector<1x24x1xf32> to vector<24x1xf32>
    %c0_38 = arith.constant 0 : index
    %c0_39 = arith.constant 0 : index
    %c0_40 = arith.constant 0 : index
    %59 = vector.load %arg11[%c0_38, %c0_39, %c0_40] : memref<2x24x1xf32, #tpu.memory_space<vmem>>, vector<1x24x1xf32>
    %60 = vector.shape_cast %59 : vector<1x24x1xf32> to vector<24x1xf32>
    %cst_41 = arith.constant dense<0.000000e+00> : vector<32xf32>
    %61 = vector.multi_reduction <add>, %56, %cst_41 [0] : vector<24x32xf32> to vector<32xf32>
    %62 = vector.shape_cast %61 : vector<32xf32> to vector<1x32xf32>
    %cst_42 = arith.constant 2.400000e+01 : f32
    %63 = vector.broadcast %cst_42 : f32 to vector<1x32xf32>
    %64 = arith.divf %62, %63 : vector<1x32xf32>
    %65 = arith.mulf %56, %56 : vector<24x32xf32>
    %cst_43 = arith.constant dense<0.000000e+00> : vector<32xf32>
    %66 = vector.multi_reduction <add>, %65, %cst_43 [0] : vector<24x32xf32> to vector<32xf32>
    %67 = vector.shape_cast %66 : vector<32xf32> to vector<1x32xf32>
    %cst_44 = arith.constant 2.400000e+01 : f32
    %68 = vector.broadcast %cst_44 : f32 to vector<1x32xf32>
    %69 = arith.divf %67, %68 : vector<1x32xf32>
    %70 = arith.mulf %64, %64 : vector<1x32xf32>
    %71 = arith.subf %69, %70 : vector<1x32xf32>
    %cst_45 = arith.constant 0.000000e+00 : f32
    %72 = vector.broadcast %cst_45 : f32 to vector<1x32xf32>
    %73 = arith.maximumf %71, %72 : vector<1x32xf32>
    %74 = vector.broadcast %64 : vector<1x32xf32> to vector<24x32xf32>
    %75 = arith.subf %56, %74 : vector<24x32xf32>
    %cst_46 = arith.constant 9.99999974E-6 : f32
    %76 = vector.broadcast %cst_46 : f32 to vector<1x32xf32>
    %77 = arith.addf %73, %76 : vector<1x32xf32>
    %78 = math.rsqrt %77 : vector<1x32xf32>
    %79 = vector.broadcast %78 : vector<1x32xf32> to vector<24x32xf32>
    %80 = arith.mulf %75, %79 : vector<24x32xf32>
    %81 = vector.broadcast %58 : vector<24x1xf32> to vector<24x32xf32>
    %82 = arith.mulf %80, %81 : vector<24x32xf32>
    %83 = vector.broadcast %60 : vector<24x1xf32> to vector<24x32xf32>
    %84 = arith.addf %82, %83 : vector<24x32xf32>
    %85 = arith.addf %6, %84 : vector<24x32xf32>
    %86 = arith.truncf %85 : vector<24x32xf32> to vector<24x32xbf16>
    %c1 = arith.constant 1 : index
    %c0_47 = arith.constant 0 : index
    %c0_48 = arith.constant 0 : index
    %87 = vector.load %arg4[%c1, %c0_47, %c0_48] : memref<2x32x32xbf16, #tpu.memory_space<vmem>>, vector<1x32x32xbf16>
    %88 = vector.shape_cast %87 : vector<1x32x32xbf16> to vector<32x32xbf16>
    %cst_49 = arith.constant dense<0.000000e+00> : vector<24x32xf32>
    %89 = tpu.matmul %86, %88, %cst_49 {dimension_numbers = #tpu.dot_dimension_numbers<[1], [0], [0], [1], [0, 0, 1, 1], [], []>} : vector<24x32xbf16>, vector<32x32xbf16>, vector<24x32xf32> -> vector<24x32xf32>
    %c1_50 = arith.constant 1 : index
    %c0_51 = arith.constant 0 : index
    %c0_52 = arith.constant 0 : index
    %90 = vector.load %arg3[%c1_50, %c0_51, %c0_52] : memref<2x24x24xbf16, #tpu.memory_space<vmem>>, vector<1x24x24xbf16>
    %91 = vector.shape_cast %90 : vector<1x24x24xbf16> to vector<24x24xbf16>
    %92 = arith.truncf %89 : vector<24x32xf32> to vector<24x32xbf16>
    %cst_53 = arith.constant dense<0.000000e+00> : vector<24x32xf32>
    %93 = tpu.matmul %91, %92, %cst_53 {dimension_numbers = #tpu.dot_dimension_numbers<[1], [0], [0], [1], [0, 0, 1, 1], [], []>} : vector<24x24xbf16>, vector<24x32xbf16>, vector<24x32xf32> -> vector<24x32xf32>
    %94 = arith.addf %85, %93 : vector<24x32xf32>
    %c1_54 = arith.constant 1 : index
    %c0_55 = arith.constant 0 : index
    %c0_56 = arith.constant 0 : index
    %95 = vector.load %arg5[%c1_54, %c0_55, %c0_56] : memref<2x1x32xf32, #tpu.memory_space<vmem>>, vector<1x1x32xf32>
    %96 = vector.shape_cast %95 : vector<1x1x32xf32> to vector<1x32xf32>
    %97 = vector.broadcast %96 : vector<1x32xf32> to vector<24x32xf32>
    %98 = arith.addf %94, %97 : vector<24x32xf32>
    %c1_57 = arith.constant 1 : index
    %c0_58 = arith.constant 0 : index
    %c0_59 = arith.constant 0 : index
    %99 = vector.load %arg6[%c1_57, %c0_58, %c0_59] : memref<2x24x1xf32, #tpu.memory_space<vmem>>, vector<1x24x1xf32>
    %100 = vector.shape_cast %99 : vector<1x24x1xf32> to vector<24x1xf32>
    %c1_60 = arith.constant 1 : index
    %c0_61 = arith.constant 0 : index
    %c0_62 = arith.constant 0 : index
    %101 = vector.load %arg7[%c1_60, %c0_61, %c0_62] : memref<2x24x1xf32, #tpu.memory_space<vmem>>, vector<1x24x1xf32>
    %102 = vector.shape_cast %101 : vector<1x24x1xf32> to vector<24x1xf32>
    %cst_63 = arith.constant dense<0.000000e+00> : vector<32xf32>
    %103 = vector.multi_reduction <add>, %98, %cst_63 [0] : vector<24x32xf32> to vector<32xf32>
    %104 = vector.shape_cast %103 : vector<32xf32> to vector<1x32xf32>
    %cst_64 = arith.constant 2.400000e+01 : f32
    %105 = vector.broadcast %cst_64 : f32 to vector<1x32xf32>
    %106 = arith.divf %104, %105 : vector<1x32xf32>
    %107 = arith.mulf %98, %98 : vector<24x32xf32>
    %cst_65 = arith.constant dense<0.000000e+00> : vector<32xf32>
    %108 = vector.multi_reduction <add>, %107, %cst_65 [0] : vector<24x32xf32> to vector<32xf32>
    %109 = vector.shape_cast %108 : vector<32xf32> to vector<1x32xf32>
    %cst_66 = arith.constant 2.400000e+01 : f32
    %110 = vector.broadcast %cst_66 : f32 to vector<1x32xf32>
    %111 = arith.divf %109, %110 : vector<1x32xf32>
    %112 = arith.mulf %106, %106 : vector<1x32xf32>
    %113 = arith.subf %111, %112 : vector<1x32xf32>
    %cst_67 = arith.constant 0.000000e+00 : f32
    %114 = vector.broadcast %cst_67 : f32 to vector<1x32xf32>
    %115 = arith.maximumf %113, %114 : vector<1x32xf32>
    %116 = vector.broadcast %106 : vector<1x32xf32> to vector<24x32xf32>
    %117 = arith.subf %98, %116 : vector<24x32xf32>
    %cst_68 = arith.constant 9.99999974E-6 : f32
    %118 = vector.broadcast %cst_68 : f32 to vector<1x32xf32>
    %119 = arith.addf %115, %118 : vector<1x32xf32>
    %120 = math.rsqrt %119 : vector<1x32xf32>
    %121 = vector.broadcast %120 : vector<1x32xf32> to vector<24x32xf32>
    %122 = arith.mulf %117, %121 : vector<24x32xf32>
    %123 = vector.broadcast %100 : vector<24x1xf32> to vector<24x32xf32>
    %124 = arith.mulf %122, %123 : vector<24x32xf32>
    %125 = vector.broadcast %102 : vector<24x1xf32> to vector<24x32xf32>
    %126 = arith.addf %124, %125 : vector<24x32xf32>
    %127 = arith.addf %85, %126 : vector<24x32xf32>
    %128 = arith.truncf %127 : vector<24x32xf32> to vector<24x32xbf16>
    %c1_69 = arith.constant 1 : index
    %c0_70 = arith.constant 0 : index
    %c0_71 = arith.constant 0 : index
    %129 = vector.load %arg8[%c1_69, %c0_70, %c0_71] : memref<2x32x32xbf16, #tpu.memory_space<vmem>>, vector<1x32x32xbf16>
    %130 = vector.shape_cast %129 : vector<1x32x32xbf16> to vector<32x32xbf16>
    %cst_72 = arith.constant dense<0.000000e+00> : vector<24x32xf32>
    %131 = tpu.matmul %128, %130, %cst_72 {dimension_numbers = #tpu.dot_dimension_numbers<[1], [0], [0], [1], [0, 0, 1, 1], [], []>} : vector<24x32xbf16>, vector<32x32xbf16>, vector<24x32xf32> -> vector<24x32xf32>
    %c1_73 = arith.constant 1 : index
    %c0_74 = arith.constant 0 : index
    %c0_75 = arith.constant 0 : index
    %132 = vector.load %arg9[%c1_73, %c0_74, %c0_75] : memref<2x1x32xf32, #tpu.memory_space<vmem>>, vector<1x1x32xf32>
    %133 = vector.shape_cast %132 : vector<1x1x32xf32> to vector<1x32xf32>
    %134 = vector.broadcast %133 : vector<1x32xf32> to vector<24x32xf32>
    %135 = arith.addf %131, %134 : vector<24x32xf32>
    %c1_76 = arith.constant 1 : index
    %c0_77 = arith.constant 0 : index
    %c0_78 = arith.constant 0 : index
    %136 = vector.load %arg10[%c1_76, %c0_77, %c0_78] : memref<2x24x1xf32, #tpu.memory_space<vmem>>, vector<1x24x1xf32>
    %137 = vector.shape_cast %136 : vector<1x24x1xf32> to vector<24x1xf32>
    %c1_79 = arith.constant 1 : index
    %c0_80 = arith.constant 0 : index
    %c0_81 = arith.constant 0 : index
    %138 = vector.load %arg11[%c1_79, %c0_80, %c0_81] : memref<2x24x1xf32, #tpu.memory_space<vmem>>, vector<1x24x1xf32>
    %139 = vector.shape_cast %138 : vector<1x24x1xf32> to vector<24x1xf32>
    %cst_82 = arith.constant dense<0.000000e+00> : vector<32xf32>
    %140 = vector.multi_reduction <add>, %135, %cst_82 [0] : vector<24x32xf32> to vector<32xf32>
    %141 = vector.shape_cast %140 : vector<32xf32> to vector<1x32xf32>
    %cst_83 = arith.constant 2.400000e+01 : f32
    %142 = vector.broadcast %cst_83 : f32 to vector<1x32xf32>
    %143 = arith.divf %141, %142 : vector<1x32xf32>
    %144 = arith.mulf %135, %135 : vector<24x32xf32>
    %cst_84 = arith.constant dense<0.000000e+00> : vector<32xf32>
    %145 = vector.multi_reduction <add>, %144, %cst_84 [0] : vector<24x32xf32> to vector<32xf32>
    %146 = vector.shape_cast %145 : vector<32xf32> to vector<1x32xf32>
    %cst_85 = arith.constant 2.400000e+01 : f32
    %147 = vector.broadcast %cst_85 : f32 to vector<1x32xf32>
    %148 = arith.divf %146, %147 : vector<1x32xf32>
    %149 = arith.mulf %143, %143 : vector<1x32xf32>
    %150 = arith.subf %148, %149 : vector<1x32xf32>
    %cst_86 = arith.constant 0.000000e+00 : f32
    %151 = vector.broadcast %cst_86 : f32 to vector<1x32xf32>
    %152 = arith.maximumf %150, %151 : vector<1x32xf32>
    %153 = vector.broadcast %143 : vector<1x32xf32> to vector<24x32xf32>
    %154 = arith.subf %135, %153 : vector<24x32xf32>
    %cst_87 = arith.constant 9.99999974E-6 : f32
    %155 = vector.broadcast %cst_87 : f32 to vector<1x32xf32>
    %156 = arith.addf %152, %155 : vector<1x32xf32>
    %157 = math.rsqrt %156 : vector<1x32xf32>
    %158 = vector.broadcast %157 : vector<1x32xf32> to vector<24x32xf32>
    %159 = arith.mulf %154, %158 : vector<24x32xf32>
    %160 = vector.broadcast %137 : vector<24x1xf32> to vector<24x32xf32>
    %161 = arith.mulf %159, %160 : vector<24x32xf32>
    %162 = vector.broadcast %139 : vector<24x1xf32> to vector<24x32xf32>
    %163 = arith.addf %161, %162 : vector<24x32xf32>
    %164 = arith.addf %85, %163 : vector<24x32xf32>
    %c0_88 = arith.constant 0 : index
    %c0_89 = arith.constant 0 : index
    %165 = vector.load %arg12[%c0_88, %c0_89] : memref<24x24xbf16, #tpu.memory_space<vmem>>, vector<24x24xbf16>
    %166 = arith.truncf %164 : vector<24x32xf32> to vector<24x32xbf16>
    %cst_90 = arith.constant dense<0.000000e+00> : vector<24x32xf32>
    %167 = tpu.matmul %165, %166, %cst_90 {dimension_numbers = #tpu.dot_dimension_numbers<[1], [0], [0], [1], [0, 0, 1, 1], [], []>} : vector<24x24xbf16>, vector<24x32xbf16>, vector<24x32xf32> -> vector<24x32xf32>
    %c0_91 = arith.constant 0 : index
    %c0_92 = arith.constant 0 : index
    %168 = vector.load %arg13[%c0_91, %c0_92] : memref<24x1xf32, #tpu.memory_space<vmem>>, vector<24x1xf32>
    %169 = vector.broadcast %168 : vector<24x1xf32> to vector<24x32xf32>
    %170 = arith.addf %167, %169 : vector<24x32xf32>
    %c0_93 = arith.constant 0 : index
    %c0_94 = arith.constant 0 : index
    %171 = vector.load %arg14[%c0_93, %c0_94] : memref<24x32xf32, #tpu.memory_space<vmem>>, vector<24x32xf32>
    tpu.vector_store %arg14[%c0_93, %c0_94], %170 {strides = array<i32>} : memref<24x32xf32, #tpu.memory_space<vmem>>, vector<24x32xf32>,
    return
  }
}

</mosaic_0001>

<llo_original>
// kernel: hypergraph_rep_forward.1
$region0: #{hypergraph_rep_forward.1}
  #allocation0 [shape = 'u32[]', space=smem, size = 0x4, offset = 0x4, fixed_abs, tag = 'smem constant byte address 0x4 - core index']
  #allocation1 [shape = 'u32[144,128]{1,0:T(1,128)}', space=vmem, size = 0x12000, scoped, tag = 'internal scratch']
  %s0 = inlined_call_operand.vmem [shape: f32[24,32], index: 0, kind: input, shape index: {}]
  %s1 = inlined_call_operand.vmem [shape: bf16[24,24], index: 1, kind: input, shape index: {}]
  %s2 = inlined_call_operand.vmem [shape: f32[24,1], index: 2, kind: input, shape index: {}]
  %s3 = inlined_call_operand.vmem [shape: bf16[2,24,24], index: 3, kind: input, shape index: {}]
  %s4 = inlined_call_operand.vmem [shape: bf16[2,32,32], index: 4, kind: input, shape index: {}]
  %s5 = inlined_call_operand.vmem [shape: f32[2,1,32], index: 5, kind: input, shape index: {}]
  %s6 = inlined_call_operand.vmem [shape: f32[2,24,1], index: 6, kind: input, shape index: {}]
  %s7 = inlined_call_operand.vmem [shape: f32[2,24,1], index: 7, kind: input, shape index: {}]
  %s8 = inlined_call_operand.vmem [shape: bf16[2,32,32], index: 8, kind: input, shape index: {}]
  %s9 = inlined_call_operand.vmem [shape: f32[2,1,32], index: 9, kind: input, shape index: {}]
  %s10 = inlined_call_operand.vmem [shape: f32[2,24,1], index: 10, kind: input, shape index: {}]
  %s11 = inlined_call_operand.vmem [shape: f32[2,24,1], index: 11, kind: input, shape index: {}]
  %s12 = inlined_call_operand.vmem [shape: bf16[24,24], index: 12, kind: input, shape index: {}]
  %s13 = inlined_call_operand.vmem [shape: f32[24,1], index: 13, kind: input, shape index: {}]
  %s14 = inlined_call_operand.vmem [shape: f32[24,32], index: 14, kind: output, shape index: {}]
  %s15 = sld [smem:[#allocation0]]
  $region66: #{hypergraph_rep_forward.1} parent=0
    _
  %s17 = ssub.s32 1, %s15
  %s18 = scalar_select 0, %s17, %s15
  // Predicated region
  $region2: #{hypergraph_rep_forward.1} parent=0 // pred_check
    _
  $region3: #{hypergraph_rep_forward.1} parent=0 // pred_check_branch
    %20 = sbr.rel (0) target = $region5
  $region4: #{hypergraph_rep_forward.1} parent=0 // pred_region
    _
  $region5: #{hypergraph_rep_forward.1} parent=0 // pred_fallthru
    _
  // Predicated region
  $region6: #{hypergraph_rep_forward.1} parent=0 // pred_check
    _
  $region7: #{hypergraph_rep_forward.1} parent=0 // pred_check_branch
    %22 = sbr.rel (0) target = $region9
  $region8: #{hypergraph_rep_forward.1} parent=0 // pred_region
    _
  $region9: #{hypergraph_rep_forward.1} parent=0 // pred_fallthru
    _
  // Predicated region
  $region10: #{hypergraph_rep_forward.1} parent=0 // pred_check
    _
  $region11: #{hypergraph_rep_forward.1} parent=0 // pred_check_branch
    %24 = sbr.rel (0) target = $region13
  $region12: #{hypergraph_rep_forward.1} parent=0 // pred_region
    _
  $region13: #{hypergraph_rep_forward.1} parent=0 // pred_fallthru
    _
  // Predicated region
  $region14: #{hypergraph_rep_forward.1} parent=0 // pred_check
    _
  $region15: #{hypergraph_rep_forward.1} parent=0 // pred_check_branch
    %26 = sbr.rel (0) target = $region17
  $region16: #{hypergraph_rep_forward.1} parent=0 // pred_region
    _
  $region17: #{hypergraph_rep_forward.1} parent=0 // pred_fallthru
    _
  // Predicated region
  $region18: #{hypergraph_rep_forward.1} parent=0 // pred_check
    _
  $region19: #{hypergraph_rep_forward.1} parent=0 // pred_check_branch
    %28 = sbr.rel (0) target = $region21
  $region20: #{hypergraph_rep_forward.1} parent=0 // pred_region
    _
  $region21: #{hypergraph_rep_forward.1} parent=0 // pred_fallthru
    _
  // Predicated region
  $region22: #{hypergraph_rep_forward.1} parent=0 // pred_check
    _
  $region23: #{hypergraph_rep_forward.1} parent=0 // pred_check_branch
    %30 = sbr.rel (0) target = $region25
  $region24: #{hypergraph_rep_forward.1} parent=0 // pred_region
    _
  $region25: #{hypergraph_rep_forward.1} parent=0 // pred_fallthru
    _
  // Predicated region
  $region26: #{hypergraph_rep_forward.1} parent=0 // pred_check
    _
  $region27: #{hypergraph_rep_forward.1} parent=0 // pred_check_branch
    %32 = sbr.rel (0) target = $region29
  $region28: #{hypergraph_rep_forward.1} parent=0 // pred_region
    _
  $region29: #{hypergraph_rep_forward.1} parent=0 // pred_fallthru
    _
  // Predicated region
  $region30: #{hypergraph_rep_forward.1} parent=0 // pred_check
    _
  $region31: #{hypergraph_rep_forward.1} parent=0 // pred_check_branch
    %34 = sbr.rel (0) target = $region33
  $region32: #{hypergraph_rep_forward.1} parent=0 // pred_region
    _
  $region33: #{hypergraph_rep_forward.1} parent=0 // pred_fallthru
    _
  // Predicated region
  $region34: #{hypergraph_rep_forward.1} parent=0 // pred_check
    _
  $region35: #{hypergraph_rep_forward.1} parent=0 // pred_check_branch
    %36 = sbr.rel (0) target = $region37
  $region36: #{hypergraph_rep_forward.1} parent=0 // pred_region
    _
  $region37: #{hypergraph_rep_forward.1} parent=0 // pred_fallthru
    _
  // Predicated region
  $region38: #{hypergraph_rep_forward.1} parent=0 // pred_check
    _
  $region39: #{hypergraph_rep_forward.1} parent=0 // pred_check_branch
    %38 = sbr.rel (0) target = $region41
  $region40: #{hypergraph_rep_forward.1} parent=0 // pred_region
    _
  $region41: #{hypergraph_rep_forward.1} parent=0 // pred_fallthru
    _
  // Predicated region
  $region42: #{hypergraph_rep_forward.1} parent=0 // pred_check
    _
  $region43: #{hypergraph_rep_forward.1} parent=0 // pred_check_branch
    %40 = sbr.rel (0) target = $region45
  $region44: #{hypergraph_rep_forward.1} parent=0 // pred_region
    _
  $region45: #{hypergraph_rep_forward.1} parent=0 // pred_fallthru
    _
  // Predicated region
  $region46: #{hypergraph_rep_forward.1} parent=0 // pred_check
    _
  $region47: #{hypergraph_rep_forward.1} parent=0 // pred_check_branch
    %42 = sbr.rel (0) target = $region49
  $region48: #{hypergraph_rep_forward.1} parent=0 // pred_region
    _
  $region49: #{hypergraph_rep_forward.1} parent=0 // pred_fallthru
    _
  // Predicated region
  $region50: #{hypergraph_rep_forward.1} parent=0 // pred_check
    _
  $region51: #{hypergraph_rep_forward.1} parent=0 // pred_check_branch
    %44 = sbr.rel (0) target = $region53
  $region52: #{hypergraph_rep_forward.1} parent=0 // pred_region
    _
  $region53: #{hypergraph_rep_forward.1} parent=0 // pred_fallthru
    _
  // Predicated region
  $region54: #{hypergraph_rep_forward.1} parent=0 // pred_check
    _
  $region55: #{hypergraph_rep_forward.1} parent=0 // pred_check_branch
    %46 = sbr.rel (0) target = $region57
  $region56: #{hypergraph_rep_forward.1} parent=0 // pred_region
    _
  $region57: #{hypergraph_rep_forward.1} parent=0 // pred_fallthru
    _
  %v48 = vld [vmem:[%s0] sm:$0xff]
  %v49 = vld [vmem:[%s0 + $0x8] sm:$0xff]
  %v50 = vld [vmem:[%s0 + $0x10] sm:$0xff]
  %v51 = vld [vmem:[%s1] sm:$0xf]
  %v52 = vld [vmem:[%s1 + $0x4] sm:$0xf]
  %v53 = vld [vmem:[%s1 + $0x8] sm:$0xf]
  %v54 = vpack.c.bf16 %v49, %v48
  %v55 = vpack.c.bf16 %v50, %v50
  %v56 = vld [vmem:[%s2] sm:$0xff]
  %v57 = vld [vmem:[%s2 + $0x8] sm:$0xff]
  %v58 = vld [vmem:[%s2 + $0x10] sm:$0xff]
  %60 = vset.pattern.permute.xlu0 0
  %61 = vperm.xlu0 %60, %v56
  %v62 = vpop.permute.xlu0 %61
  %65 = vset.pattern.permute.xlu0 0
  %66 = vperm.xlu0 %65, %v57
  %v67 = vpop.permute.xlu0 %66
  %70 = vset.pattern.permute.xlu0 0
  %71 = vperm.xlu0 %70, %v58
  %v72 = vpop.permute.xlu0 %71
  %v77 = vunpack.c.l.b16 %v51
  %v78 = vunpack.c.l.b16 %v52
  %v79 = vunpack.c.l.b16 %v53
  %v80 = vpack.c.b16 %v78, %v77
  %v81 = vpack.c.b16 %v79, %v79
  %vm82 = vcmask 195584
  %v84 = vsel %vm82, %v80, 0
  %v87 = vsel %vm82, %v81, 0
  %vm89 = vcmask 1043456
  %v91 = vsel %vm89, %v55, 0
  %93 = vmatprep.subr.bf16.mxu0 0
  %94 = vmatpush1.bf16.msra.mxu0 0
  %95 = vmatprep.subr.bf16.mxu0 0
  %96 = vmatpush1.bf16.msra.mxu0 0
  %97 = vmatprep.subr.bf16.mxu0 0
  %98 = vmatpush1.bf16.msra.mxu0 0
  %99 = vmatprep.subr.bf16.mxu0 0
  %100 = vmatpush1.bf16.msra.mxu0 0
  %101 = vmatprep.subr.bf16.mxu0 0
  %102 = vmatpush1.bf16.msra.mxu0 0
  %103 = vmatprep.subr.bf16.mxu0 0
  %104 = vmatpush1.bf16.msra.mxu0 0
  %105 = vmatprep.subr.bf16.mxu0 0
  %106 = vmatpush1.bf16.msra.mxu0 %v91
  %107 = vmatprep.subr.bf16.mxu0 0
  %108 = vmatpush1.bf16.msra.mxu0 %v54
  %109 = vmatprep.subr.bf16.mxu0 0
  %110 = vmatpush2.bf16.msra.mxu0 0
  %111 = vmatprep.subr.bf16.mxu0 0
  %112 = vmatpush2.bf16.msra.mxu0 0
  %113 = vmatprep.subr.bf16.mxu0 0
  %114 = vmatpush2.bf16.msra.mxu0 0
  %115 = vmatprep.subr.bf16.mxu0 0
  %116 = vmatpush2.bf16.msra.mxu0 0
  %117 = vmatprep.subr.bf16.mxu0 0
  %118 = vmatpush2.bf16.msra.mxu0 0
  %119 = vmatprep.subr.bf16.mxu0 0
  %120 = vmatpush2.bf16.msra.mxu0 0
  %121 = vmatprep.subr.bf16.mxu0 0
  %122 = vmatpush2.bf16.msra.mxu0 0
  %123 = vmatprep.subr.bf16.mxu0 0
  %124 = vmatpush2.bf16.msra.mxu0 0
  %125 = vmatprep.mubr.bf16.mxu0 0
  %126 = vmatmul.mubr.bf16.gmra.mxu0 %v84
  %v127 = vpop.f32.mrf.mxu0
  %v128 = vadd.f32 %v62, %v127
  %v129 = vpop.f32.mrf.mxu0
  %v130 = vpop.f32.mrf.mxu0
  %v131 = vadd.f32 %v67, %v130
  %v132 = vpop.f32.mrf.mxu0
  %133 = vmatprep.mubr.bf16.mxu0 0
  %134 = vmatmul.mubr.bf16.gmra.mxu0 %v87
  %v135 = vpop.f32.mrf.mxu0
  %v136 = vadd.f32 %v72, %v135
  %v137 = vpop.f32.mrf.mxu0
  %v138 = vpop.f32.mrf.mxu0
  %v139 = vpop.f32.mrf.mxu0
  %140 = vdwg.mxu0
  %v141 = vpack.c.bf16 %v131, %v128
  %v142 = vpack.c.bf16 %v136, %v136
  %v143 = vld [vmem:[%s4] sm:$0xf]
  %v144 = vld [vmem:[%s4 + $0x4] sm:$0xf]
  %v145 = vld [vmem:[%s4 + $0x8] sm:$0xf]
  %v146 = vld [vmem:[%s4 + $0xc] sm:$0xf]
  %v151 = vunpack.c.l.b16 %v143
  %v152 = vunpack.c.l.b16 %v144
  %v153 = vunpack.c.l.b16 %v145
  %v154 = vunpack.c.l.b16 %v146
  %v155 = vpack.c.b16 %v152, %v151
  %v156 = vpack.c.b16 %v154, %v153
  %vm159 = vcmask 261120
  %v161 = vsel %vm159, %v141, 0
  %v164 = vsel %vm159, %v142, 0
  %166 = vmatprep.subr.bf16.mxu0 0
  %167 = vmatpush1.bf16.msra.mxu0 0
  %168 = vmatprep.subr.bf16.mxu0 0
  %169 = vmatpush1.bf16.msra.mxu0 0
  %170 = vmatprep.subr.bf16.mxu0 0
  %171 = vmatpush1.bf16.msra.mxu0 0
  %172 = vmatprep.subr.bf16.mxu0 0
  %173 = vmatpush1.bf16.msra.mxu0 0
  %174 = vmatprep.subr.bf16.mxu0 0
  %175 = vmatpush1.bf16.msra.mxu0 0
  %176 = vmatprep.subr.bf16.mxu0 0
  %177 = vmatpush1.bf16.msra.mxu0 0
  %178 = vmatprep.subr.bf16.mxu0 0
  %179 = vmatpush1.bf16.msra.mxu0 %v156
  %180 = vmatprep.subr.bf16.mxu0 0
  %181 = vmatpush1.bf16.msra.mxu0 %v155
  %182 = vmatprep.subr.bf16.mxu0 0
  %183 = vmatpush2.bf16.msra.mxu0 0
  %184 = vmatprep.subr.bf16.mxu0 0
  %185 = vmatpush2.bf16.msra.mxu0 0
  %186 = vmatprep.subr.bf16.mxu0 0
  %187 = vmatpush2.bf16.msra.mxu0 0
  %188 = vmatprep.subr.bf16.mxu0 0
  %189 = vmatpush2.bf16.msra.mxu0 0
  %190 = vmatprep.subr.bf16.mxu0 0
  %191 = vmatpush2.bf16.msra.mxu0 0
  %192 = vmatprep.subr.bf16.mxu0 0
  %193 = vmatpush2.bf16.msra.mxu0 0
  %194 = vmatprep.subr.bf16.mxu0 0
  %195 = vmatpush2.bf16.msra.mxu0 0
  %196 = vmatprep.subr.bf16.mxu0 0
  %197 = vmatpush2.bf16.msra.mxu0 0
  %198 = vmatprep.mubr.bf16.mxu0 0
  %199 = vmatmul.mubr.bf16.gmra.mxu0 %v161
  %v200 = vpop.f32.mrf.mxu0
  %v201 = vadd.f32 0.0, %v200
  %v202 = vpop.f32.mrf.mxu0
  %v203 = vpop.f32.mrf.mxu0
  %v204 = vadd.f32 0.0, %v203
  %v205 = vpop.f32.mrf.mxu0
  %206 = vmatprep.mubr.bf16.mxu0 0
  %207 = vmatmul.mubr.bf16.gmra.mxu0 %v164
  %v208 = vpop.f32.mrf.mxu0
  %v209 = vadd.f32 0.0, %v208
  %v210 = vpop.f32.mrf.mxu0
  %v211 = vpop.f32.mrf.mxu0
  %v212 = vpop.f32.mrf.mxu0
  %213 = vdwg.mxu0
  %v214 = vld [vmem:[%s3] sm:$0xf]
  %v215 = vld [vmem:[%s3 + $0x4] sm:$0xf]
  %v216 = vld [vmem:[%s3 + $0x8] sm:$0xf]
  %v217 = vpack.c.bf16 %v204, %v201
  %v218 = vpack.c.bf16 %v209, %v209
  %v222 = vunpack.c.l.b16 %v214
  %v223 = vunpack.c.l.b16 %v215
  %v224 = vunpack.c.l.b16 %v216
  %v225 = vpack.c.b16 %v223, %v222
  %v226 = vpack.c.b16 %v224, %v224
  %v228 = vsel %vm82, %v225, 0
  %v231 = vsel %vm82, %v226, 0
  %v234 = vsel %vm89, %v218, 0
  %236 = vmatprep.subr.bf16.mxu0 0
  %237 = vmatpush1.bf16.msra.mxu0 0
  %238 = vmatprep.subr.bf16.mxu0 0
  %239 = vmatpush1.bf16.msra.mxu0 0
  %240 = vmatprep.subr.bf16.mxu0 0
  %241 = vmatpush1.bf16.msra.mxu0 0
  %242 = vmatprep.subr.bf16.mxu0 0
  %243 = vmatpush1.bf16.msra.mxu0 0
  %244 = vmatprep.subr.bf16.mxu0 0
  %245 = vmatpush1.bf16.msra.mxu0 0
  %246 = vmatprep.subr.bf16.mxu0 0
  %247 = vmatpush1.bf16.msra.mxu0 0
  %248 = vmatprep.subr.bf16.mxu0 0
  %249 = vmatpush1.bf16.msra.mxu0 %v234
  %250 = vmatprep.subr.bf16.mxu0 0
  %251 = vmatpush1.bf16.msra.mxu0 %v217
  %252 = vmatprep.subr.bf16.mxu0 0
  %253 = vmatpush2.bf16.msra.mxu0 0
  %254 = vmatprep.subr.bf16.mxu0 0
  %255 = vmatpush2.bf16.msra.mxu0 0
  %256 = vmatprep.subr.bf16.mxu0 0
  %257 = vmatpush2.bf16.msra.mxu0 0
  %258 = vmatprep.subr.bf16.mxu0 0
  %259 = vmatpush2.bf16.msra.mxu0 0
  %260 = vmatprep.subr.bf16.mxu0 0
  %261 = vmatpush2.bf16.msra.mxu0 0
  %262 = vmatprep.subr.bf16.mxu0 0
  %263 = vmatpush2.bf16.msra.mxu0 0
  %264 = vmatprep.subr.bf16.mxu0 0
  %265 = vmatpush2.bf16.msra.mxu0 0
  %266 = vmatprep.subr.bf16.mxu0 0
  %267 = vmatpush2.bf16.msra.mxu0 0
  %268 = vmatprep.mubr.bf16.mxu0 0
  %269 = vmatmul.mubr.bf16.gmra.mxu0 %v228
  %v270 = vpop.f32.mrf.mxu0
  %v271 = vadd.f32 0.0, %v270
  %v272 = vpop.f32.mrf.mxu0
  %v273 = vpop.f32.mrf.mxu0
  %v274 = vadd.f32 0.0, %v273
  %v275 = vpop.f32.mrf.mxu0
  %276 = vmatprep.mubr.bf16.mxu0 0
  %277 = vmatmul.mubr.bf16.gmra.mxu0 %v231
  %v278 = vpop.f32.mrf.mxu0
  %v279 = vadd.f32 0.0, %v278
  %v280 = vpop.f32.mrf.mxu0
  %v281 = vpop.f32.mrf.mxu0
  %v282 = vpop.f32.mrf.mxu0
  %283 = vdwg.mxu0
  %v284 = vadd.f32 %v128, %v271
  %v285 = vadd.f32 %v131, %v274
  %v286 = vadd.f32 %v136, %v279
  %v287 = vld [vmem:[%s5] sm:$0x1]
  %v289 = vlaneseq
  %v290 = vshrl.u32 %v289, 7
  %v291 = vsub.s32 0, %v290
  %v292 = vrot.slane %v287, %v291
  %v294 = vadd.f32 %v284, %v292
  %v295 = vadd.f32 %v285, %v292
  %v296 = vadd.f32 %v286, %v292
  %v297 = vld [vmem:[%s6] sm:$0xff]
  %v298 = vld [vmem:[%s6 + $0x8] sm:$0xff]
  %v299 = vld [vmem:[%s6 + $0x10] sm:$0xff]
  %v300 = vld [vmem:[%s7] sm:$0xff]
  %v301 = vld [vmem:[%s7 + $0x8] sm:$0xff]
  %v302 = vld [vmem:[%s7 + $0x10] sm:$0xff]
  %v303 = vsel %vm159, %v294, 0.0
  %v304 = vsel %vm159, %v295, 0.0
  %v305 = vadd.f32 %v303, %v304
  %v306 = vsel %vm159, %v296, 0.0
  %v307 = vadd.f32 %v305, %v306
  %v308 = vrot.slane %v307, 4
  %v309 = vadd.f32 %v307, %v308
  %v310 = vrot.slane %v309, 2
  %v311 = vadd.f32 %v309, %v310
  %v312 = vrot.slane %v311, 1
  %v313 = vadd.f32 %v311, %v312
  %v314 = vrcp.pop 24.0
  %v315 = vmul.f32 %v313, %v314
  %v316 = vmul.f32 %v294, %v294
  %v317 = vmul.f32 %v295, %v295
  %v318 = vmul.f32 %v296, %v296
  %v319 = vsel %vm159, %v316, 0.0
  %v320 = vsel %vm159, %v317, 0.0
  %v321 = vadd.f32 %v319, %v320
  %v322 = vsel %vm159, %v318, 0.0
  %v323 = vadd.f32 %v321, %v322
  %v324 = vrot.slane %v323, 4
  %v325 = vadd.f32 %v323, %v324
  %v326 = vrot.slane %v325, 2
  %v327 = vadd.f32 %v325, %v326
  %v328 = vrot.slane %v327, 1
  %v329 = vadd.f32 %v327, %v328
  %v330 = vmul.f32 %v329, %v314
  %v331 = vmul.f32 %v315, %v315
  %v332 = vsub.f32 %v330, %v331
  %v333 = vmax.f32 %v332, 0.0
  %v334 = vsub.f32 %v294, %v315
  %v335 = vsub.f32 %v295, %v315
  %v336 = vsub.f32 %v296, %v315
  %v337 = vadd.f32 %v333, 1e-05
  %v338 = vrsqrt.pop %v337
  %v339 = vmul.f32 %v334, %v338
  %v340 = vmul.f32 %v335, %v338
  %v341 = vmul.f32 %v336, %v338
  %343 = vset.pattern.permute.xlu0 0
  %344 = vperm.xlu0 %343, %v297
  %v345 = vpop.permute.xlu0 %344
  %348 = vset.pattern.permute.xlu0 0
  %349 = vperm.xlu0 %348, %v298
  %v350 = vpop.permute.xlu0 %349
  %353 = vset.pattern.permute.xlu0 0
  %354 = vperm.xlu0 %353, %v299
  %v355 = vpop.permute.xlu0 %354
  %v357 = vmul.f32 %v339, %v345
  %v358 = vmul.f32 %v340, %v350
  %v359 = vmul.f32 %v341, %v355
  %361 = vset.pattern.permute.xlu0 0
  %362 = vperm.xlu0 %361, %v300
  %v363 = vpop.permute.xlu0 %362
  %366 = vset.pattern.permute.xlu0 0
  %367 = vperm.xlu0 %366, %v301
  %v368 = vpop.permute.xlu0 %367
  %371 = vset.pattern.permute.xlu0 0
  %372 = vperm.xlu0 %371, %v302
  %v373 = vpop.permute.xlu0 %372
  %v375 = vadd.f32 %v357, %v363
  %v376 = vadd.f32 %v358, %v368
  %v377 = vadd.f32 %v359, %v373
  %v378 = vadd.f32 %v128, %v375
  %v379 = vadd.f32 %v131, %v376
  %v380 = vadd.f32 %v136, %v377
  %v381 = vpack.c.bf16 %v379, %v378
  %v382 = vpack.c.bf16 %v380, %v380
  %v383 = vld [vmem:[%s8] sm:$0xf]
  %v384 = vld [vmem:[%s8 + $0x4] sm:$0xf]
  %v385 = vld [vmem:[%s8 + $0x8] sm:$0xf]
  %v386 = vld [vmem:[%s8 + $0xc] sm:$0xf]
  %v387 = vld [vmem:[%s9] sm:$0x1]
  %v389 = vlaneseq
  %v390 = vshrl.u32 %v389, 7
  %v391 = vsub.s32 0, %v390
  %v392 = vrot.slane %v387, %v391
  %v398 = vunpack.c.l.b16 %v383
  %v399 = vunpack.c.l.b16 %v384
  %v400 = vunpack.c.l.b16 %v385
  %v401 = vunpack.c.l.b16 %v386
  %v402 = vpack.c.b16 %v399, %v398
  %v403 = vpack.c.b16 %v401, %v400
  %v407 = vsel %vm159, %v381, 0
  %v410 = vsel %vm159, %v382, 0
  %412 = vmatprep.subr.bf16.mxu0 0
  %413 = vmatpush1.bf16.msra.mxu0 0
  %414 = vmatprep.subr.bf16.mxu0 0
  %415 = vmatpush1.bf16.msra.mxu0 0
  %416 = vmatprep.subr.bf16.mxu0 0
  %417 = vmatpush1.bf16.msra.mxu0 0
  %418 = vmatprep.subr.bf16.mxu0 0
  %419 = vmatpush1.bf16.msra.mxu0 0
  %420 = vmatprep.subr.bf16.mxu0 0
  %421 = vmatpush1.bf16.msra.mxu0 0
  %422 = vmatprep.subr.bf16.mxu0 0
  %423 = vmatpush1.bf16.msra.mxu0 0
  %424 = vmatprep.subr.bf16.mxu0 0
  %425 = vmatpush1.bf16.msra.mxu0 %v403
  %426 = vmatprep.subr.bf16.mxu0 0
  %427 = vmatpush1.bf16.msra.mxu0 %v402
  %428 = vmatprep.subr.bf16.mxu0 0
  %429 = vmatpush2.bf16.msra.mxu0 0
  %430 = vmatprep.subr.bf16.mxu0 0
  %431 = vmatpush2.bf16.msra.mxu0 0
  %432 = vmatprep.subr.bf16.mxu0 0
  %433 = vmatpush2.bf16.msra.mxu0 0
  %434 = vmatprep.subr.bf16.mxu0 0
  %435 = vmatpush2.bf16.msra.mxu0 0
  %436 = vmatprep.subr.bf16.mxu0 0
  %437 = vmatpush2.bf16.msra.mxu0 0
  %438 = vmatprep.subr.bf16.mxu0 0
  %439 = vmatpush2.bf16.msra.mxu0 0
  %440 = vmatprep.subr.bf16.mxu0 0
  %441 = vmatpush2.bf16.msra.mxu0 0
  %442 = vmatprep.subr.bf16.mxu0 0
  %443 = vmatpush2.bf16.msra.mxu0 0
  %444 = vmatprep.mubr.bf16.mxu0 0
  %445 = vmatmul.mubr.bf16.gmra.mxu0 %v407
  %v446 = vpop.f32.mrf.mxu0
  %v447 = vadd.f32 %v392, %v446
  %v448 = vpop.f32.mrf.mxu0
  %v449 = vpop.f32.mrf.mxu0
  %v450 = vadd.f32 %v392, %v449
  %v451 = vpop.f32.mrf.mxu0
  %452 = vmatprep.mubr.bf16.mxu0 0
  %453 = vmatmul.mubr.bf16.gmra.mxu0 %v410
  %v454 = vpop.f32.mrf.mxu0
  %v455 = vadd.f32 %v392, %v454
  %v456 = vpop.f32.mrf.mxu0
  %v457 = vpop.f32.mrf.mxu0
  %v458 = vpop.f32.mrf.mxu0
  %459 = vdwg.mxu0
  %v460 = vld [vmem:[%s10] sm:$0xff]
  %v461 = vld [vmem:[%s10 + $0x8] sm:$0xff]
  %v462 = vld [vmem:[%s10 + $0x10] sm:$0xff]
  %v463 = vld [vmem:[%s11] sm:$0xff]
  %v464 = vld [vmem:[%s11 + $0x8] sm:$0xff]
  %v465 = vld [vmem:[%s11 + $0x10] sm:$0xff]
  %v466 = vsel %vm159, %v447, 0.0
  %v467 = vsel %vm159, %v450, 0.0
  %v468 = vadd.f32 %v466, %v467
  %v469 = vsel %vm159, %v455, 0.0
  %v470 = vadd.f32 %v468, %v469
  %v471 = vrot.slane %v470, 4
  %v472 = vadd.f32 %v470, %v471
  %v473 = vrot.slane %v472, 2
  %v474 = vadd.f32 %v472, %v473
  %v475 = vrot.slane %v474, 1
  %v476 = vadd.f32 %v474, %v475
  %v477 = vmul.f32 %v476, %v314
  %v478 = vmul.f32 %v447, %v447
  %v479 = vmul.f32 %v450, %v450
  %v480 = vmul.f32 %v455, %v455
  %v481 = vsel %vm159, %v478, 0.0
  %v482 = vsel %vm159, %v479, 0.0
  %v483 = vadd.f32 %v481, %v482
  %v484 = vsel %vm159, %v480, 0.0
  %v485 = vadd.f32 %v483, %v484
  %v486 = vrot.slane %v485, 4
  %v487 = vadd.f32 %v485, %v486
  %v488 = vrot.slane %v487, 2
  %v489 = vadd.f32 %v487, %v488
  %v490 = vrot.slane %v489, 1
  %v491 = vadd.f32 %v489, %v490
  %v492 = vmul.f32 %v491, %v314
  %v493 = vmul.f32 %v477, %v477
  %v494 = vsub.f32 %v492, %v493
  %v495 = vmax.f32 %v494, 0.0
  %v496 = vsub.f32 %v447, %v477
  %v497 = vsub.f32 %v450, %v477
  %v498 = vsub.f32 %v455, %v477
  %v499 = vadd.f32 %v495, 1e-05
  %v500 = vrsqrt.pop %v499
  %v501 = vmul.f32 %v496, %v500
  %v502 = vmul.f32 %v497, %v500
  %v503 = vmul.f32 %v498, %v500
  %505 = vset.pattern.permute.xlu0 0
  %506 = vperm.xlu0 %505, %v460
  %v507 = vpop.permute.xlu0 %506
  %510 = vset.pattern.permute.xlu0 0
  %511 = vperm.xlu0 %510, %v461
  %v512 = vpop.permute.xlu0 %511
  %515 = vset.pattern.permute.xlu0 0
  %516 = vperm.xlu0 %515, %v462
  %v517 = vpop.permute.xlu0 %516
  %v519 = vmul.f32 %v501, %v507
  %v520 = vmul.f32 %v502, %v512
  %v521 = vmul.f32 %v503, %v517
  %523 = vset.pattern.permute.xlu0 0
  %524 = vperm.xlu0 %523, %v463
  %v525 = vpop.permute.xlu0 %524
  %528 = vset.pattern.permute.xlu0 0
  %529 = vperm.xlu0 %528, %v464
  %v530 = vpop.permute.xlu0 %529
  %533 = vset.pattern.permute.xlu0 0
  %534 = vperm.xlu0 %533, %v465
  %v535 = vpop.permute.xlu0 %534
  %v537 = vadd.f32 %v519, %v525
  %v538 = vadd.f32 %v520, %v530
  %v539 = vadd.f32 %v521, %v535
  %v540 = vadd.f32 %v128, %v537
  %v541 = vadd.f32 %v131, %v538
  %v542 = vadd.f32 %v136, %v539
  %v543 = vpack.c.bf16 %v541, %v540
  %v544 = vpack.c.bf16 %v542, %v542
  %s545 = scalar_lea.vmem %s4, 16
  %v546 = vld [vmem:[%s545] sm:$0xf]
  %v547 = vld [vmem:[%s545 + $0x4] sm:$0xf]
  %v548 = vld [vmem:[%s545 + $0x8] sm:$0xf]
  %v549 = vld [vmem:[%s545 + $0xc] sm:$0xf]
  %v554 = vunpack.c.l.b16 %v546
  %v555 = vunpack.c.l.b16 %v547
  %v556 = vunpack.c.l.b16 %v548
  %v557 = vunpack.c.l.b16 %v549
  %v558 = vpack.c.b16 %v555, %v554
  %v559 = vpack.c.b16 %v557, %v556
  %v563 = vsel %vm159, %v543, 0
  %v566 = vsel %vm159, %v544, 0
  %568 = vmatprep.subr.bf16.mxu0 0
  %569 = vmatpush1.bf16.msra.mxu0 0
  %570 = vmatprep.subr.bf16.mxu0 0
  %571 = vmatpush1.bf16.msra.mxu0 0
  %572 = vmatprep.subr.bf16.mxu0 0
  %573 = vmatpush1.bf16.msra.mxu0 0
  %574 = vmatprep.subr.bf16.mxu0 0
  %575 = vmatpush1.bf16.msra.mxu0 0
  %576 = vmatprep.subr.bf16.mxu0 0
  %577 = vmatpush1.bf16.msra.mxu0 0
  %578 = vmatprep.subr.bf16.mxu0 0
  %579 = vmatpush1.bf16.msra.mxu0 0
  %580 = vmatprep.subr.bf16.mxu0 0
  %581 = vmatpush1.bf16.msra.mxu0 %v559
  %582 = vmatprep.subr.bf16.mxu0 0
  %583 = vmatpush1.bf16.msra.mxu0 %v558
  %584 = vmatprep.subr.bf16.mxu0 0
  %585 = vmatpush2.bf16.msra.mxu0 0
  %586 = vmatprep.subr.bf16.mxu0 0
  %587 = vmatpush2.bf16.msra.mxu0 0
  %588 = vmatprep.subr.bf16.mxu0 0
  %589 = vmatpush2.bf16.msra.mxu0 0
  %590 = vmatprep.subr.bf16.mxu0 0
  %591 = vmatpush2.bf16.msra.mxu0 0
  %592 = vmatprep.subr.bf16.mxu0 0
  %593 = vmatpush2.bf16.msra.mxu0 0
  %594 = vmatprep.subr.bf16.mxu0 0
  %595 = vmatpush2.bf16.msra.mxu0 0
  %596 = vmatprep.subr.bf16.mxu0 0
  %597 = vmatpush2.bf16.msra.mxu0 0
  %598 = vmatprep.subr.bf16.mxu0 0
  %599 = vmatpush2.bf16.msra.mxu0 0
  %600 = vmatprep.mubr.bf16.mxu0 0
  %601 = vmatmul.mubr.bf16.gmra.mxu0 %v563
  %v602 = vpop.f32.mrf.mxu0
  %v603 = vadd.f32 0.0, %v602
  %v604 = vpop.f32.mrf.mxu0
  %v605 = vpop.f32.mrf.mxu0
  %v606 = vadd.f32 0.0, %v605
  %v607 = vpop.f32.mrf.mxu0
  %608 = vmatprep.mubr.bf16.mxu0 0
  %609 = vmatmul.mubr.bf16.gmra.mxu0 %v566
  %v610 = vpop.f32.mrf.mxu0
  %v611 = vadd.f32 0.0, %v610
  %v612 = vpop.f32.mrf.mxu0
  %v613 = vpop.f32.mrf.mxu0
  %v614 = vpop.f32.mrf.mxu0
  %615 = vdwg.mxu0
  %s616 = scalar_lea.vmem %s3, 12
  %v617 = vld [vmem:[%s616] sm:$0xf]
  %v618 = vld [vmem:[%s616 + $0x4] sm:$0xf]
  %v619 = vld [vmem:[%s616 + $0x8] sm:$0xf]
  %v620 = vpack.c.bf16 %v606, %v603
  %v621 = vpack.c.bf16 %v611, %v611
  %v625 = vunpack.c.l.b16 %v617
  %v626 = vunpack.c.l.b16 %v618
  %v627 = vunpack.c.l.b16 %v619
  %v628 = vpack.c.b16 %v626, %v625
  %v629 = vpack.c.b16 %v627, %v627
  %v631 = vsel %vm82, %v628, 0
  %v634 = vsel %vm82, %v629, 0
  %v637 = vsel %vm89, %v621, 0
  %639 = vmatprep.subr.bf16.mxu0 0
  %640 = vmatpush1.bf16.msra.mxu0 0
  %641 = vmatprep.subr.bf16.mxu0 0
  %642 = vmatpush1.bf16.msra.mxu0 0
  %643 = vmatprep.subr.bf16.mxu0 0
  %644 = vmatpush1.bf16.msra.mxu0 0
  %645 = vmatprep.subr.bf16.mxu0 0
  %646 = vmatpush1.bf16.msra.mxu0 0
  %647 = vmatprep.subr.bf16.mxu0 0
  %648 = vmatpush1.bf16.msra.mxu0 0
  %649 = vmatprep.subr.bf16.mxu0 0
  %650 = vmatpush1.bf16.msra.mxu0 0
  %651 = vmatprep.subr.bf16.mxu0 0
  %652 = vmatpush1.bf16.msra.mxu0 %v637
  %653 = vmatprep.subr.bf16.mxu0 0
  %654 = vmatpush1.bf16.msra.mxu0 %v620
  %655 = vmatprep.subr.bf16.mxu0 0
  %656 = vmatpush2.bf16.msra.mxu0 0
  %657 = vmatprep.subr.bf16.mxu0 0
  %658 = vmatpush2.bf16.msra.mxu0 0
  %659 = vmatprep.subr.bf16.mxu0 0
  %660 = vmatpush2.bf16.msra.mxu0 0
  %661 = vmatprep.subr.bf16.mxu0 0
  %662 = vmatpush2.bf16.msra.mxu0 0
  %663 = vmatprep.subr.bf16.mxu0 0
  %664 = vmatpush2.bf16.msra.mxu0 0
  %665 = vmatprep.subr.bf16.mxu0 0
  %666 = vmatpush2.bf16.msra.mxu0 0
  %667 = vmatprep.subr.bf16.mxu0 0
  %668 = vmatpush2.bf16.msra.mxu0 0
  %669 = vmatprep.subr.bf16.mxu0 0
  %670 = vmatpush2.bf16.msra.mxu0 0
  %671 = vmatprep.mubr.bf16.mxu0 0
  %672 = vmatmul.mubr.bf16.gmra.mxu0 %v631
  %v673 = vpop.f32.mrf.mxu0
  %v674 = vadd.f32 0.0, %v673
  %v675 = vpop.f32.mrf.mxu0
  %v676 = vpop.f32.mrf.mxu0
  %v677 = vadd.f32 0.0, %v676
  %v678 = vpop.f32.mrf.mxu0
  %679 = vmatprep.mubr.bf16.mxu0 0
  %680 = vmatmul.mubr.bf16.gmra.mxu0 %v634
  %v681 = vpop.f32.mrf.mxu0
  %v682 = vadd.f32 0.0, %v681
  %v683 = vpop.f32.mrf.mxu0
  %v684 = vpop.f32.mrf.mxu0
  %v685 = vpop.f32.mrf.mxu0
  %686 = vdwg.mxu0
  %v687 = vadd.f32 %v540, %v674
  %v688 = vadd.f32 %v541, %v677
  %v689 = vadd.f32 %v542, %v682
  %s690 = scalar_lea.vmem %s5, 1
  %v691 = vld [vmem:[%s690] sm:$0x1]
  %v693 = vlaneseq
  %v694 = vshrl.u32 %v693, 7
  %v695 = vsub.s32 0, %v694
  %v696 = vrot.slane %v691, %v695
  %v698 = vadd.f32 %v687, %v696
  %v699 = vadd.f32 %v688, %v696
  %v700 = vadd.f32 %v689, %v696
  %s701 = scalar_lea.vmem %s6, 24
  %v702 = vld [vmem:[%s701] sm:$0xff]
  %v703 = vld [vmem:[%s701 + $0x8] sm:$0xff]
  %v704 = vld [vmem:[%s701 + $0x10] sm:$0xff]
  %s705 = scalar_lea.vmem %s7, 24
  %v706 = vld [vmem:[%s705] sm:$0xff]
  %v707 = vld [vmem:[%s705 + $0x8] sm:$0xff]
  %v708 = vld [vmem:[%s705 + $0x10] sm:$0xff]
  %v709 = vsel %vm159, %v698, 0.0
  %v710 = vsel %vm159, %v699, 0.0
  %v711 = vadd.f32 %v709, %v710
  %v712 = vsel %vm159, %v700, 0.0
  %v713 = vadd.f32 %v711, %v712
  %v714 = vrot.slane %v713, 4
  %v715 = vadd.f32 %v713, %v714
  %v716 = vrot.slane %v715, 2
  %v717 = vadd.f32 %v715, %v716
  %v718 = vrot.slane %v717, 1
  %v719 = vadd.f32 %v717, %v718
  %v720 = vmul.f32 %v719, %v314
  %v721 = vmul.f32 %v698, %v698
  %v722 = vmul.f32 %v699, %v699
  %v723 = vmul.f32 %v700, %v700
  %v724 = vsel %vm159, %v721, 0.0
  %v725 = vsel %vm159, %v722, 0.0
  %v726 = vadd.f32 %v724, %v725
  %v727 = vsel %vm159, %v723, 0.0
  %v728 = vadd.f32 %v726, %v727
  %v729 = vrot.slane %v728, 4
  %v730 = vadd.f32 %v728, %v729
  %v731 = vrot.slane %v730, 2
  %v732 = vadd.f32 %v730, %v731
  %v733 = vrot.slane %v732, 1
  %v734 = vadd.f32 %v732, %v733
  %v735 = vmul.f32 %v734, %v314
  %v736 = vmul.f32 %v720, %v720
  %v737 = vsub.f32 %v735, %v736
  %v738 = vmax.f32 %v737, 0.0
  %v739 = vsub.f32 %v698, %v720
  %v740 = vsub.f32 %v699, %v720
  %v741 = vsub.f32 %v700, %v720
  %v742 = vadd.f32 %v738, 1e-05
  %v743 = vrsqrt.pop %v742
  %v744 = vmul.f32 %v739, %v743
  %v745 = vmul.f32 %v740, %v743
  %v746 = vmul.f32 %v741, %v743
  %748 = vset.pattern.permute.xlu0 0
  %749 = vperm.xlu0 %748, %v702
  %v750 = vpop.permute.xlu0 %749
  %753 = vset.pattern.permute.xlu0 0
  %754 = vperm.xlu0 %753, %v703
  %v755 = vpop.permute.xlu0 %754
  %758 = vset.pattern.permute.xlu0 0
  %759 = vperm.xlu0 %758, %v704
  %v760 = vpop.permute.xlu0 %759
  %v762 = vmul.f32 %v744, %v750
  %v763 = vmul.f32 %v745, %v755
  %v764 = vmul.f32 %v746, %v760
  %766 = vset.pattern.permute.xlu0 0
  %767 = vperm.xlu0 %766, %v706
  %v768 = vpop.permute.xlu0 %767
  %771 = vset.pattern.permute.xlu0 0
  %772 = vperm.xlu0 %771, %v707
  %v773 = vpop.permute.xlu0 %772
  %776 = vset.pattern.permute.xlu0 0
  %777 = vperm.xlu0 %776, %v708
  %v778 = vpop.permute.xlu0 %777
  %v780 = vadd.f32 %v762, %v768
  %v781 = vadd.f32 %v763, %v773
  %v782 = vadd.f32 %v764, %v778
  %v783 = vadd.f32 %v540, %v780
  %v784 = vadd.f32 %v541, %v781
  %v785 = vadd.f32 %v542, %v782
  %v786 = vpack.c.bf16 %v784, %v783
  %v787 = vpack.c.bf16 %v785, %v785
  %s788 = scalar_lea.vmem %s8, 16
  %v789 = vld [vmem:[%s788] sm:$0xf]
  %v790 = vld [vmem:[%s788 + $0x4] sm:$0xf]
  %v791 = vld [vmem:[%s788 + $0x8] sm:$0xf]
  %v792 = vld [vmem:[%s788 + $0xc] sm:$0xf]
  %s793 = scalar_lea.vmem %s9, 1
  %v794 = vld [vmem:[%s793] sm:$0x1]
  %v796 = vlaneseq
  %v797 = vshrl.u32 %v796, 7
  %v798 = vsub.s32 0, %v797
  %v799 = vrot.slane %v794, %v798
  %v805 = vunpack.c.l.b16 %v789
  %v806 = vunpack.c.l.b16 %v790
  %v807 = vunpack.c.l.b16 %v791
  %v808 = vunpack.c.l.b16 %v792
  %v809 = vpack.c.b16 %v806, %v805
  %v810 = vpack.c.b16 %v808, %v807
  %v814 = vsel %vm159, %v786, 0
  %v817 = vsel %vm159, %v787, 0
  %819 = vmatprep.subr.bf16.mxu0 0
  %820 = vmatpush1.bf16.msra.mxu0 0
  %821 = vmatprep.subr.bf16.mxu0 0
  %822 = vmatpush1.bf16.msra.mxu0 0
  %823 = vmatprep.subr.bf16.mxu0 0
  %824 = vmatpush1.bf16.msra.mxu0 0
  %825 = vmatprep.subr.bf16.mxu0 0
  %826 = vmatpush1.bf16.msra.mxu0 0
  %827 = vmatprep.subr.bf16.mxu0 0
  %828 = vmatpush1.bf16.msra.mxu0 0
  %829 = vmatprep.subr.bf16.mxu0 0
  %830 = vmatpush1.bf16.msra.mxu0 0
  %831 = vmatprep.subr.bf16.mxu0 0
  %832 = vmatpush1.bf16.msra.mxu0 %v810
  %833 = vmatprep.subr.bf16.mxu0 0
  %834 = vmatpush1.bf16.msra.mxu0 %v809
  %835 = vmatprep.subr.bf16.mxu0 0
  %836 = vmatpush2.bf16.msra.mxu0 0
  %837 = vmatprep.subr.bf16.mxu0 0
  %838 = vmatpush2.bf16.msra.mxu0 0
  %839 = vmatprep.subr.bf16.mxu0 0
  %840 = vmatpush2.bf16.msra.mxu0 0
  %841 = vmatprep.subr.bf16.mxu0 0
  %842 = vmatpush2.bf16.msra.mxu0 0
  %843 = vmatprep.subr.bf16.mxu0 0
  %844 = vmatpush2.bf16.msra.mxu0 0
  %845 = vmatprep.subr.bf16.mxu0 0
  %846 = vmatpush2.bf16.msra.mxu0 0
  %847 = vmatprep.subr.bf16.mxu0 0
  %848 = vmatpush2.bf16.msra.mxu0 0
  %849 = vmatprep.subr.bf16.mxu0 0
  %850 = vmatpush2.bf16.msra.mxu0 0
  %851 = vmatprep.mubr.bf16.mxu0 0
  %852 = vmatmul.mubr.bf16.gmra.mxu0 %v814
  %v853 = vpop.f32.mrf.mxu0
  %v854 = vadd.f32 %v799, %v853
  %v855 = vpop.f32.mrf.mxu0
  %v856 = vpop.f32.mrf.mxu0
  %v857 = vadd.f32 %v799, %v856
  %v858 = vpop.f32.mrf.mxu0
  %859 = vmatprep.mubr.bf16.mxu0 0
  %860 = vmatmul.mubr.bf16.gmra.mxu0 %v817
  %v861 = vpop.f32.mrf.mxu0
  %v862 = vadd.f32 %v799, %v861
  %v863 = vpop.f32.mrf.mxu0
  %v864 = vpop.f32.mrf.mxu0
  %v865 = vpop.f32.mrf.mxu0
  %866 = vdwg.mxu0
  %s867 = scalar_lea.vmem %s10, 24
  %v868 = vld [vmem:[%s867] sm:$0xff]
  %v869 = vld [vmem:[%s867 + $0x8] sm:$0xff]
  %v870 = vld [vmem:[%s867 + $0x10] sm:$0xff]
  %s871 = scalar_lea.vmem %s11, 24
  %v872 = vld [vmem:[%s871] sm:$0xff]
  %v873 = vld [vmem:[%s871 + $0x8] sm:$0xff]
  %v874 = vld [vmem:[%s871 + $0x10] sm:$0xff]
  %v875 = vsel %vm159, %v854, 0.0
  %v876 = vsel %vm159, %v857, 0.0
  %v877 = vadd.f32 %v875, %v876
  %v878 = vsel %vm159, %v862, 0.0
  %v879 = vadd.f32 %v877, %v878
  %v880 = vrot.slane %v879, 4
  %v881 = vadd.f32 %v879, %v880
  %v882 = vrot.slane %v881, 2
  %v883 = vadd.f32 %v881, %v882
  %v884 = vrot.slane %v883, 1
  %v885 = vadd.f32 %v883, %v884
  %v886 = vmul.f32 %v885, %v314
  %v887 = vmul.f32 %v854, %v854
  %v888 = vmul.f32 %v857, %v857
  %v889 = vmul.f32 %v862, %v862
  %v890 = vsel %vm159, %v887, 0.0
  %v891 = vsel %vm159, %v888, 0.0
  %v892 = vadd.f32 %v890, %v891
  %v893 = vsel %vm159, %v889, 0.0
  %v894 = vadd.f32 %v892, %v893
  %v895 = vrot.slane %v894, 4
  %v896 = vadd.f32 %v894, %v895
  %v897 = vrot.slane %v896, 2
  %v898 = vadd.f32 %v896, %v897
  %v899 = vrot.slane %v898, 1
  %v900 = vadd.f32 %v898, %v899
  %v901 = vmul.f32 %v900, %v314
  %v902 = vmul.f32 %v886, %v886
  %v903 = vsub.f32 %v901, %v902
  %v904 = vmax.f32 %v903, 0.0
  %v905 = vsub.f32 %v854, %v886
  %v906 = vsub.f32 %v857, %v886
  %v907 = vsub.f32 %v862, %v886
  %v908 = vadd.f32 %v904, 1e-05
  %v909 = vrsqrt.pop %v908
  %v910 = vmul.f32 %v905, %v909
  %v911 = vmul.f32 %v906, %v909
  %v912 = vmul.f32 %v907, %v909
  %914 = vset.pattern.permute.xlu0 0
  %915 = vperm.xlu0 %914, %v868
  %v916 = vpop.permute.xlu0 %915
  %919 = vset.pattern.permute.xlu0 0
  %920 = vperm.xlu0 %919, %v869
  %v921 = vpop.permute.xlu0 %920
  %924 = vset.pattern.permute.xlu0 0
  %925 = vperm.xlu0 %924, %v870
  %v926 = vpop.permute.xlu0 %925
  %v928 = vmul.f32 %v910, %v916
  %v929 = vmul.f32 %v911, %v921
  %v930 = vmul.f32 %v912, %v926
  %932 = vset.pattern.permute.xlu0 0
  %933 = vperm.xlu0 %932, %v872
  %v934 = vpop.permute.xlu0 %933
  %937 = vset.pattern.permute.xlu0 0
  %938 = vperm.xlu0 %937, %v873
  %v939 = vpop.permute.xlu0 %938
  %942 = vset.pattern.permute.xlu0 0
  %943 = vperm.xlu0 %942, %v874
  %v944 = vpop.permute.xlu0 %943
  %v946 = vadd.f32 %v928, %v934
  %v947 = vadd.f32 %v929, %v939
  %v948 = vadd.f32 %v930, %v944
  %v949 = vadd.f32 %v540, %v946
  %v950 = vadd.f32 %v541, %v947
  %v951 = vadd.f32 %v542, %v948
  %v952 = vld [vmem:[%s12] sm:$0xf]
  %v953 = vld [vmem:[%s12 + $0x4] sm:$0xf]
  %v954 = vld [vmem:[%s12 + $0x8] sm:$0xf]
  %v955 = vpack.c.bf16 %v950, %v949
  %v956 = vpack.c.bf16 %v951, %v951
  %v957 = vld [vmem:[%s13] sm:$0xff]
  %v958 = vld [vmem:[%s13 + $0x8] sm:$0xff]
  %v959 = vld [vmem:[%s13 + $0x10] sm:$0xff]
  %961 = vset.pattern.permute.xlu0 0
  %962 = vperm.xlu0 %961, %v957
  %v963 = vpop.permute.xlu0 %962
  %966 = vset.pattern.permute.xlu0 0
  %967 = vperm.xlu0 %966, %v958
  %v968 = vpop.permute.xlu0 %967
  %971 = vset.pattern.permute.xlu0 0
  %972 = vperm.xlu0 %971, %v959
  %v973 = vpop.permute.xlu0 %972
  %v978 = vunpack.c.l.b16 %v952
  %v979 = vunpack.c.l.b16 %v953
  %v980 = vunpack.c.l.b16 %v954
  %v981 = vpack.c.b16 %v979, %v978
  %v982 = vpack.c.b16 %v980, %v980
  %v984 = vsel %vm82, %v981, 0
  %v987 = vsel %vm82, %v982, 0
  %v990 = vsel %vm89, %v956, 0
  %992 = vmatprep.subr.bf16.mxu0 0
  %993 = vmatpush1.bf16.msra.mxu0 0
  %994 = vmatprep.subr.bf16.mxu0 0
  %995 = vmatpush1.bf16.msra.mxu0 0
  %996 = vmatprep.subr.bf16.mxu0 0
  %997 = vmatpush1.bf16.msra.mxu0 0
  %998 = vmatprep.subr.bf16.mxu0 0
  %999 = vmatpush1.bf16.msra.mxu0 0
  %1000 = vmatprep.subr.bf16.mxu0 0
  %1001 = vmatpush1.bf16.msra.mxu0 0
  %1002 = vmatprep.subr.bf16.mxu0 0
  %1003 = vmatpush1.bf16.msra.mxu0 0
  %1004 = vmatprep.subr.bf16.mxu0 0
  %1005 = vmatpush1.bf16.msra.mxu0 %v990
  %1006 = vmatprep.subr.bf16.mxu0 0
  %1007 = vmatpush1.bf16.msra.mxu0 %v955
  %1008 = vmatprep.subr.bf16.mxu0 0
  %1009 = vmatpush2.bf16.msra.mxu0 0
  %1010 = vmatprep.subr.bf16.mxu0 0
  %1011 = vmatpush2.bf16.msra.mxu0 0
  %1012 = vmatprep.subr.bf16.mxu0 0
  %1013 = vmatpush2.bf16.msra.mxu0 0
  %1014 = vmatprep.subr.bf16.mxu0 0
  %1015 = vmatpush2.bf16.msra.mxu0 0
  %1016 = vmatprep.subr.bf16.mxu0 0
  %1017 = vmatpush2.bf16.msra.mxu0 0
  %1018 = vmatprep.subr.bf16.mxu0 0
  %1019 = vmatpush2.bf16.msra.mxu0 0
  %1020 = vmatprep.subr.bf16.mxu0 0
  %1021 = vmatpush2.bf16.msra.mxu0 0
  %1022 = vmatprep.subr.bf16.mxu0 0
  %1023 = vmatpush2.bf16.msra.mxu0 0
  %1024 = vmatprep.mubr.bf16.mxu0 0
  %1025 = vmatmul.mubr.bf16.gmra.mxu0 %v984
  %v1026 = vpop.f32.mrf.mxu0
  %v1027 = vadd.f32 %v963, %v1026
  %v1028 = vpop.f32.mrf.mxu0
  %v1029 = vpop.f32.mrf.mxu0
  %v1030 = vadd.f32 %v968, %v1029
  %v1031 = vpop.f32.mrf.mxu0
  %1032 = vmatprep.mubr.bf16.mxu0 0
  %1033 = vmatmul.mubr.bf16.gmra.mxu0 %v987
  %v1034 = vpop.f32.mrf.mxu0
  %v1035 = vadd.f32 %v973, %v1034
  %v1036 = vpop.f32.mrf.mxu0
  %v1037 = vpop.f32.mrf.mxu0
  %v1038 = vpop.f32.mrf.mxu0
  %1039 = vdwg.mxu0
  %1040 = vst.msk [vmem:[%s14] sm:$0xff] %vm159, %v1027
  %1041 = vst.msk [vmem:[%s14 + $0x8] sm:$0xff] %vm159, %v1030
  %1042 = vst.msk [vmem:[%s14 + $0x10] sm:$0xff] %vm159, %v1035
  // Predicated region
  $region58: #{hypergraph_rep_forward.1} parent=0 // pred_check
    _
  $region59: #{hypergraph_rep_forward.1} parent=0 // pred_check_branch
    %1044 = sbr.rel (0) target = $region61
  $region60: #{hypergraph_rep_forward.1} parent=0 // pred_region
    _
  $region61: #{hypergraph_rep_forward.1} parent=0 // pred_fallthru
    _
  // Predicated region
  $region62: #{hypergraph_rep_forward.1} parent=0 // pred_check
    _
  $region63: #{hypergraph_rep_forward.1} parent=0 // pred_check_branch
    %1046 = sbr.rel (0) target = $region65
  $region64: #{hypergraph_rep_forward.1} parent=0 // pred_region
    _
  $region65: #{hypergraph_rep_forward.1} parent=0 // pred_fallthru
    _

</llo_original>
